<compile_context>
chip_gen: v7x
topology: tpu7x:2x2x1
jax: 0.10.0
libtpu: 0.0.40
codegen_flags: <defaults>
</compile_context>

<pallas_src>
import functools
import math

import jax
import jax.numpy as jnp
from jax.experimental import pallas as pl
from jax.experimental.pallas import tpu as pltpu

_LANES = 128
_MIN_BLOCK_ROWS = 32     # multiple of 32 rows keeps sublane tiling valid for f32/bf16/int8 slabs
_MAX_BLOCK_ROWS = 1024   # 1024 x 128 x 4B = 512 KiB per input block
_NUM_SPLITS = 2          # leading 'parallel' grid axis -> v7x megacore sharding


def _round_up(x, m):
    return ((x + m - 1) // m) * m


def _fused_loss_kernel(w_ref, r_scale_ref, r_ref, a_ref, b_ref, o_ref, acc_ref):
    """Per grid step: weighted |a - b| accumulated element-wise into a block-shaped
    VMEM accumulator (pure VPU). Final cross-lane reduce + r_hat term only once,
    on the last step of each split."""
    c = pl.program_id(0)              # megacore split (parallel)
    i = pl.program_id(1)              # row-block within split (reduction, arbitrary)
    nb = pl.num_programs(1)

    @pl.when(i == 0)
    def _():
        acc_ref[...] = jnp.zeros_like(acc_ref)

    w = w_ref[c * nb + i]             # FM_weight / n_elements of this block's segment (0 for pad)
    a = a_ref[...].astype(jnp.float32)
    b = b_ref[...].astype(jnp.float32)
    acc_ref[...] += jnp.abs(a - b) * w

    @pl.when(i == nb - 1)
    def _():
        fm_part = jnp.sum(acc_ref[...])
        # -mean(r_hat): contributed exactly once, by split 0 (branch-free gate).
        r_part = (jnp.sum(r_ref[...]) * r_scale_ref[0]
                  * (c == 0).astype(jnp.float32))
        o_ref[...] = jnp.reshape(fm_part + r_part, (1, 1, 1))


@functools.partial(jax.jit, static_argnames=("fm_weight",))
def loss_adv(r_hat, D_res_list, D_hat_res_list, fm_weight=10.0):
    D_res_list = list(D_res_list)
    D_hat_res_list = list(D_hat_res_list)
    assert len(D_res_list) == len(D_hat_res_list)

    # ---------- static geometry (shapes known at trace time) ----------------
    seg_n = [math.prod(x.shape) for x in D_res_list]           # element counts
    seg_rows = [max(1, -(-n // _LANES)) for n in seg_n]        # 128-lane rows

    max_rows = max(seg_rows) if seg_rows else _MIN_BLOCK_ROWS
    block_rows = min(_MAX_BLOCK_ROWS,
                     _round_up(max(max_rows, _MIN_BLOCK_ROWS), _MIN_BLOCK_ROWS))

    seg_blocks = [-(-r // block_rows) for r in seg_rows]       # blocks per segment
    total_blocks = sum(seg_blocks)
    total_blocks_padded = _round_up(max(total_blocks, _NUM_SPLITS), _NUM_SPLITS)
    nb_per_split = total_blocks_padded // _NUM_SPLITS
    extra_blocks = total_blocks_padded - total_blocks

    # ---------- slab dtype: keep features in native dtype, upcast in-kernel --
    if D_res_list:
        slab_dtype = jnp.result_type(*[x.dtype for x in D_res_list + D_hat_res_list])
        if not jnp.issubdtype(slab_dtype, jnp.floating):
            slab_dtype = jnp.float32
    else:
        slab_dtype = jnp.float32

    seg_elems = [blk * block_rows * _LANES for blk in seg_blocks]

    def build_slab(tensors):
        pieces = []
        for x, tot in zip(tensors, seg_elems):
            flat = jnp.ravel(x).astype(slab_dtype)
            pieces.append(flat)
            pad = tot - flat.shape[0]
            if pad:
                pieces.append(jnp.zeros((pad,), slab_dtype))
        if extra_blocks:
            pieces.append(jnp.zeros((extra_blocks * block_rows * _LANES,), slab_dtype))
        if not pieces:
            pieces.append(jnp.zeros((total_blocks_padded * block_rows * _LANES,),
                                    slab_dtype))
        return jnp.concatenate(pieces).reshape(-1, _LANES)

    a_slab = build_slab(D_res_list)
    b_slab = build_slab(D_hat_res_list)

    # per-block weight = FM_weight / n_segment (0 for padding blocks) -> SMEM
    w_host = []
    for n, blk in zip(seg_n, seg_blocks):
        w_host.extend([float(fm_weight) / float(n)] * blk)
    w_host.extend([0.0] * extra_blocks)
    w = jnp.asarray(w_host, dtype=jnp.float32)

    # ---------- r_hat slab (tiny, resident in VMEM for the whole grid) -------
    n_r = math.prod(r_hat.shape)
    r_rows = _round_up(max(1, -(-n_r // _LANES)), 8)
    r_flat = jnp.ravel(r_hat).astype(jnp.float32)
    r_pad = r_rows * _LANES - n_r
    if r_pad:
        r_flat = jnp.concatenate([r_flat, jnp.zeros((r_pad,), jnp.float32)])
    r2d = r_flat.reshape(r_rows, _LANES)
    r_scale = jnp.asarray([-1.0 / float(n_r)], dtype=jnp.float32)

    nb = nb_per_split  # captured statically by the index maps

    partials = pl.pallas_call(
        _fused_loss_kernel,
        out_shape=jax.ShapeDtypeStruct((_NUM_SPLITS, 1, 1), jnp.float32),
        grid_spec=pltpu.PrefetchScalarGridSpec(
            num_scalar_prefetch=2,                        # w, r_scale -> SMEM
            grid=(_NUM_SPLITS, nb_per_split),
            in_specs=[
                pl.BlockSpec((r_rows, _LANES), lambda c, i, *_: (0, 0)),
                pl.BlockSpec((block_rows, _LANES),
                             lambda c, i, *_: (c * nb + i, 0)),
                pl.BlockSpec((block_rows, _LANES),
                             lambda c, i, *_: (c * nb + i, 0)),
            ],
            out_specs=pl.BlockSpec((1, 1, 1), lambda c, i, *_: (c, 0, 0)),
            scratch_shapes=[pltpu.VMEM((block_rows, _LANES), jnp.float32)],
        ),
        compiler_params=pltpu.CompilerParams(
            dimension_semantics=("parallel", "arbitrary"),
        ),
    )(w, r_scale, r2d, a_slab, b_slab)

    # trivial glue: sum the (at most 2) per-split partials
    return jnp.sum(partials)


def _reference(r_hat, D_res_list, D_hat_res_list, fm_weight=10.0):
    loss_fm = 0.0
    for res, res_hat in zip(D_res_list, D_hat_res_list):
        loss_fm = loss_fm + jnp.mean(jnp.abs(res - res_hat))
    return -jnp.mean(jnp.squeeze(r_hat)) + loss_fm * fm_weight


if __name__ == "__main__":
    key = jax.random.PRNGKey(0)
    k = jax.random.split(key, 8)

    # r_hat: discriminator realness scores, shape (B, 1)
    r_hat = jax.random.normal(k[0], (2, 1), dtype=jnp.float32)

    # Discriminator intermediate feature maps (NCHW), real vs. generated.
    D_res_list = [
        jax.random.normal(k[1], (2, 4, 16, 16), dtype=jnp.float32),
        jax.random.normal(k[2], (2, 8, 8, 8), dtype=jnp.float32),
        jax.random.normal(k[3], (2, 16, 4, 4), dtype=jnp.float32),
    ]
    D_hat_res_list = [
        jax.random.normal(k[4], (2, 4, 16, 16), dtype=jnp.float32),
        jax.random.normal(k[5], (2, 8, 8, 8), dtype=jnp.float32),
        jax.random.normal(k[6], (2, 16, 4, 4), dtype=jnp.float32),
    ]

    out = loss_adv(r_hat, D_res_list, D_hat_res_list, fm_weight=10.0)
    out = jax.block_until_ready(out)

    ref = _reference(r_hat, D_res_list, D_hat_res_list, fm_weight=10.0)
    assert jnp.allclose(out, ref, rtol=1e-4, atol=1e-4), (out, ref)

    print("KERNEL_OK")
</pallas_src>

<mosaic_0001>
module attributes {stable_mosaic.version = 11 : i64} {
  func.func @_fused_loss_kernel(%arg0: i32, %arg1: i32, %arg2: memref<4xf32, #tpu.memory_space<smem>>, %arg3: memref<1xf32, #tpu.memory_space<smem>>, %arg4: memref<8x128xf32, #tpu.memory_space<vmem>>, %arg5: memref<32x128xf32, #tpu.memory_space<vmem>>, %arg6: memref<32x128xf32, #tpu.memory_space<vmem>>, %arg7: memref<1x1x1xf32, #tpu.memory_space<vmem>>, %arg8: memref<32x128xf32, #tpu.memory_space<vmem>>) attributes {dimension_semantics = [#tpu.dimension_semantics<parallel>, #tpu.dimension_semantics<arbitrary>], iteration_bounds = array<i64: 2, 2>, scalar_prefetch = 2 : i64, scratch_operands = 1 : i64, tpu.core_type = #tpu.core_type<tc>, window_params = [{pipeline_mode = #tpu.pipeline_mode<synchronous>, transform_indices = @transform_0, window_bounds = array<i64: 8, 128>}, {transform_indices = @transform_1, window_bounds = array<i64: 32, 128>}, {transform_indices = @transform_2, window_bounds = array<i64: 32, 128>}, {transform_indices = @transform_3, window_bounds = array<i64: 1, 1, 1>}]} {
    %c0_i32 = arith.constant 0 : i32
    %0 = arith.cmpi eq, %arg1, %c0_i32 : i32
    %1 = arith.extui %0 : i1 to i32
    %c0_i32_0 = arith.constant 0 : i32
    %2 = arith.cmpi ne, %1, %c0_i32_0 : i32
    scf.if %2 {
      %cst = arith.constant 0.000000e+00 : f32
      %19 = vector.broadcast %cst : f32 to vector<32x128xf32>
      %c0_9 = arith.constant 0 : index
      %c0_10 = arith.constant 0 : index
      %20 = vector.load %arg8[%c0_9, %c0_10] : memref<32x128xf32, #tpu.memory_space<vmem>>, vector<32x128xf32>
      tpu.vector_store %arg8[%c0_9, %c0_10], %19 {strides = array<i32>} : memref<32x128xf32, #tpu.memory_space<vmem>>, vector<32x128xf32>,
    } else {
    }
    %c2_i32 = arith.constant 2 : i32
    %3 = arith.muli %arg0, %c2_i32 : i32
    %4 = arith.addi %3, %arg1 : i32
    %5 = arith.index_cast %4 : i32 to index
    %6 = memref.load %arg2[%5] : memref<4xf32, #tpu.memory_space<smem>>
    %c0 = arith.constant 0 : index
    %c0_1 = arith.constant 0 : index
    %7 = vector.load %arg5[%c0, %c0_1] : memref<32x128xf32, #tpu.memory_space<vmem>>, vector<32x128xf32>
    %c0_2 = arith.constant 0 : index
    %c0_3 = arith.constant 0 : index
    %8 = vector.load %arg6[%c0_2, %c0_3] : memref<32x128xf32, #tpu.memory_space<vmem>>, vector<32x128xf32>
    %c0_4 = arith.constant 0 : index
    %c0_5 = arith.constant 0 : index
    %9 = vector.load %arg8[%c0_4, %c0_5] : memref<32x128xf32, #tpu.memory_space<vmem>>, vector<32x128xf32>
    %10 = arith.subf %7, %8 : vector<32x128xf32>
    %11 = math.absf %10 : vector<32x128xf32>
    %12 = vector.broadcast %6 : f32 to vector<32x128xf32>
    %13 = arith.mulf %11, %12 : vector<32x128xf32>
    %14 = arith.addf %9, %13 : vector<32x128xf32>
    %c0_6 = arith.constant 0 : index
    %c0_7 = arith.constant 0 : index
    %15 = vector.load %arg8[%c0_6, %c0_7] : memref<32x128xf32, #tpu.memory_space<vmem>>, vector<32x128xf32>
    tpu.vector_store %arg8[%c0_6, %c0_7], %14 {strides = array<i32>} : memref<32x128xf32, #tpu.memory_space<vmem>>, vector<32x128xf32>,
    %c1_i32 = arith.constant 1 : i32
    %16 = arith.cmpi eq, %arg1, %c1_i32 : i32
    %17 = arith.extui %16 : i1 to i32
    %c0_i32_8 = arith.constant 0 : i32
    %18 = arith.cmpi ne, %17, %c0_i32_8 : i32
    scf.if %18 {
      %c0_9 = arith.constant 0 : index
      %c0_10 = arith.constant 0 : index
      %19 = vector.load %arg8[%c0_9, %c0_10] : memref<32x128xf32, #tpu.memory_space<vmem>>, vector<32x128xf32>
      %20 = vector.shape_cast %19 : vector<32x128xf32> to vector<1x32x128xf32>
      %cst = arith.constant dense<0.000000e+00> : vector<1xf32>
      %21 = vector.multi_reduction <add>, %20, %cst [1, 2] : vector<1x32x128xf32> to vector<1xf32>
      %22 = vector.shape_cast %21 : vector<1xf32> to vector<1x1x1xf32>
      %23 = vector.extract %22[0, 0, 0] : f32 from vector<1x1x1xf32>
      %c0_11 = arith.constant 0 : index
      %c0_12 = arith.constant 0 : index
      %24 = vector.load %arg4[%c0_11, %c0_12] : memref<8x128xf32, #tpu.memory_space<vmem>>, vector<8x128xf32>
      %25 = vector.shape_cast %24 : vector<8x128xf32> to vector<1x8x128xf32>
      %cst_13 = arith.constant dense<0.000000e+00> : vector<1xf32>
      %26 = vector.multi_reduction <add>, %25, %cst_13 [1, 2] : vector<1x8x128xf32> to vector<1xf32>
      %27 = vector.shape_cast %26 : vector<1xf32> to vector<1x1x1xf32>
      %28 = vector.extract %27[0, 0, 0] : f32 from vector<1x1x1xf32>
      %c0_14 = arith.constant 0 : index
      %29 = memref.load %arg3[%c0_14] : memref<1xf32, #tpu.memory_space<smem>>
      %30 = arith.mulf %28, %29 : f32
      %c0_i32_15 = arith.constant 0 : i32
      %31 = arith.cmpi eq, %arg0, %c0_i32_15 : i32
      %32 = arith.extui %31 : i1 to i32
      %33 = arith.sitofp %32 : i32 to f32
      %34 = arith.mulf %30, %33 : f32
      %35 = arith.addf %23, %34 : f32
      %36 = vector.broadcast %35 : f32 to vector<1x1x1xf32>
      %c0_16 = arith.constant 0 : index
      %c0_17 = arith.constant 0 : index
      %c0_18 = arith.constant 0 : index
      %37 = vector.load %arg7[%c0_16, %c0_17, %c0_18] : memref<1x1x1xf32, #tpu.memory_space<vmem>>, vector<1x1x1xf32>
      tpu.vector_store %arg7[%c0_16, %c0_17, %c0_18], %36 {strides = array<i32>} : memref<1x1x1xf32, #tpu.memory_space<vmem>>, vector<1x1x1xf32>,
    } else {
    }
    return
  }
  func.func @transform_0(%arg0: i32, %arg1: i32, %arg2: memref<4xf32, #tpu.memory_space<smem>>, %arg3: memref<1xf32, #tpu.memory_space<smem>>) -> (i32, i32) {
    %c0_i32 = arith.constant 0 : i32
    %c0_i32_0 = arith.constant 0 : i32
    %c0_i32_1 = arith.constant 0 : i32
    return %c0_i32, %c0_i32_0 : i32, i32
  }
  func.func @transform_1(%arg0: i32, %arg1: i32, %arg2: memref<4xf32, #tpu.memory_space<smem>>, %arg3: memref<1xf32, #tpu.memory_space<smem>>) -> (i32, i32) {
    %c2_i32 = arith.constant 2 : i32
    %0 = arith.muli %arg0, %c2_i32 : i32
    %1 = arith.addi %0, %arg1 : i32
    %c0_i32 = arith.constant 0 : i32
    %c0_i32_0 = arith.constant 0 : i32
    return %1, %c0_i32 : i32, i32
  }
  func.func @transform_2(%arg0: i32, %arg1: i32, %arg2: memref<4xf32, #tpu.memory_space<smem>>, %arg3: memref<1xf32, #tpu.memory_space<smem>>) -> (i32, i32) {
    %c2_i32 = arith.constant 2 : i32
    %0 = arith.muli %arg0, %c2_i32 : i32
    %1 = arith.addi %0, %arg1 : i32
    %c0_i32 = arith.constant 0 : i32
    %c0_i32_0 = arith.constant 0 : i32
    return %1, %c0_i32 : i32, i32
  }
  func.func @transform_3(%arg0: i32, %arg1: i32, %arg2: memref<4xf32, #tpu.memory_space<smem>>, %arg3: memref<1xf32, #tpu.memory_space<smem>>) -> (i32, i32, i32) {
    %c0_i32 = arith.constant 0 : i32
    %c0_i32_0 = arith.constant 0 : i32
    %c0_i32_1 = arith.constant 0 : i32
    return %arg0, %c0_i32, %c0_i32_0 : i32, i32, i32
  }
}

</mosaic_0001>

<llo_original>
// kernel: loss_adv.1
$region0: #{loss_adv.1}
  #allocation0 [shape = 'u32[]', space=smem, size = 0x4, offset = 0x4, fixed_abs, tag = 'smem constant byte address 0x4 - core index']
  #allocation1 [shape = 'u32[144,128]{1,0:T(1,128)}', space=vmem, size = 0x12000, scoped, tag = 'internal scratch']
  #allocation2 [shape = 'f32[32,128]{1,0:T(8,128)}', space=vmem, size = 0x4000, scoped, tag = 'scratch operand']
  #allocation3 [shape = 's32[1]{0}', space=sflag, size = 0x4, scoped, tag = 'scoped memory for loss_adv.1']
  #allocation4 [shape = 'u8[512]{0}', space=smem, size = 0x200, scoped, tag = 'prefetched SMEM operand 0']
  #allocation5 [shape = 'f32[1]{0:T(128)S(6)}', space=smem, size = 0x200, scoped, tag = 'prefetched SMEM operand 1']
  %s0 = inlined_call_operand.vmem [shape: f32[4], index: 0, kind: input, shape index: {}]
  %s1 = inlined_call_operand.<no memory space> [shape: f32[1], index: 1, kind: input, shape index: {}]
  %s2 = inlined_call_operand.vmem [shape: f32[8,128], index: 2, kind: input, shape index: {}]
  %s3 = inlined_call_operand.vmem [shape: f32[128,128], index: 3, kind: input, shape index: {}]
  %s4 = inlined_call_operand.vmem [shape: f32[128,128], index: 4, kind: input, shape index: {}]
  %s5 = inlined_call_operand.vmem [shape: f32[2,1,1], index: 5, kind: output, shape index: {}]
  %s6 = sld [smem:[#allocation0]]
  $region53: #{loss_adv.1} parent=0
    _
  %s8 = ssub.s32 1, %s6
  %s9 = scalar_select 0, %s8, %s6
  %s10 = sshll.u32 %s0, 4
  %s11 = int_to_ptr.vmem [resolvable:$true] %s10
  %13 = dma.vmem_to_smem %s11, 16, [#allocation4], [#allocation3]
  %14 = sst [smem:[#allocation5]] %s1
  %15 = dma.done [#allocation3], 16
  %16 = sfence
  loop: start=0, step=1, limit=6
  $region2: #{loss_adv.1} parent=0 // loop_pre_header
    _
  $region3: #{loss_adv.1} parent=0 // loop_header
    %s18 = sphi 0, %s22
    %p19 = scmp.ge.s32.totalorder %s18, 6
    %s25 = sphi 0, %s37
    %s26 = sphi 0, %s33
    %s27 = sphi 0, %s25
    %s28 = sphi 0, %s26
    %s29 = sphi 0, %s27
    %s30 = sphi 0, %s28
    %s38 = sphi 0, %s38
    %s40 = sphi 0, %s38
    %s41 = sphi 0, %s40
    %s55 = sphi 0, %s41
    %s65 = sphi 0, %s67
    %s68 = sphi 0, %s65
    %s69 = sphi 0, %s68
    %s85 = sphi 0, %s69
    %s95 = sphi 0, %s97
    %s98 = sphi 0, %s95
    %s99 = sphi 0, %s98
    %s115 = sphi 0, %s99
    %s121 = sphi 0, %s123
    %s124 = sphi 0, %s121
    %s125 = sphi 0, %s124
    %s141 = sphi 0, %s125
  $region4: #{loss_adv.1} parent=0 // loop_header_branch
    %21 = sbr.rel (%p19) target = $region8
  $region5: #{loss_adv.1} parent=0 // loop_body
    %s23 = ssub.s32 %s18, 1
    %s24 = ssub.s32 %s18, 2
    %s31 = sadd.s32 1, %s26
    %p32 = scmp.ge.s32.totalorder %s31, 2
    %s33 = scalar_select %p32, 0, %s31
    %s34 = sadd.s32 1, %s25
    %s35 = scalar_select %p32, %s34, %s25
    %p36 = scmp.ge.s32.totalorder %s35, 2
    %s37 = scalar_select %p36, 0, %s35
    %s39 = sadd.s32 %s38, 1
    %p42 = scmp.eq.s32.totalorder %s18, 3
    %p43 = scmp.ne.s32.totalorder %s38, %s40
    %p44 = scmp.eq.s32.totalorder %s18, 0
    %p45 = por %p43, %p44
    %p46 = scmp.ne.s32.totalorder %s38, %s40
    %p47 = scmp.eq.s32.totalorder %s23, 3
    %p48 = por %p46, %p47
    %p49 = scmp.ne.s32.totalorder %s40, %s41
    %p50 = scmp.eq.s32.totalorder %s23, 0
    %p51 = por %p49, %p50
    %p52 = scmp.ne.s32.totalorder %s40, %s41
    %p53 = scmp.eq.s32.totalorder %s24, 3
    %p54 = por %p52, %p53
    %p56 = scmp.ne.s32.totalorder %s41, %s55
    %p57 = scmp.eq.s32.totalorder %s24, 0
    %p58 = por %p56, %p57
    %s59 = smul.u32 %s25, 2
    %s60 = sadd.s32 %s59, %s26
    %s61 = smul.u32 %s37, 2
    %s62 = sadd.s32 %s61, %s33
    %s63 = ssub.s32 %s60, %s62
    %p64 = scmp.eq.s32.totalorder %s63, 0
    %s66 = sadd.s32 %s65, 1
    %s67 = scalar_select %p64, %s65, %s66
    %p70 = pneg %p64
    %p71 = scmp.eq.s32.totalorder %s18, 3
    %p72 = por %p70, %p71
    %p73 = scmp.ne.s32.totalorder %s65, %s68
    %p74 = scmp.eq.s32.totalorder %s18, 0
    %p75 = por %p73, %p74
    %p76 = scmp.ne.s32.totalorder %s65, %s68
    %p77 = scmp.eq.s32.totalorder %s23, 3
    %p78 = por %p76, %p77
    %p79 = scmp.ne.s32.totalorder %s68, %s69
    %p80 = scmp.eq.s32.totalorder %s23, 0
    %p81 = por %p79, %p80
    %p82 = scmp.ne.s32.totalorder %s68, %s69
    %p83 = scmp.eq.s32.totalorder %s24, 3
    %p84 = por %p82, %p83
    %p86 = scmp.ne.s32.totalorder %s69, %s85
    %p87 = scmp.eq.s32.totalorder %s24, 0
    %p88 = por %p86, %p87
    %s89 = smul.u32 %s25, 2
    %s90 = sadd.s32 %s89, %s26
    %s91 = smul.u32 %s37, 2
    %s92 = sadd.s32 %s91, %s33
    %s93 = ssub.s32 %s90, %s92
    %p94 = scmp.eq.s32.totalorder %s93, 0
    %s96 = sadd.s32 %s95, 1
    %s97 = scalar_select %p94, %s95, %s96
    %p100 = pneg %p94
    %p101 = scmp.eq.s32.totalorder %s18, 3
    %p102 = por %p100, %p101
    %p103 = scmp.ne.s32.totalorder %s95, %s98
    %p104 = scmp.eq.s32.totalorder %s18, 0
    %p105 = por %p103, %p104
    %p106 = scmp.ne.s32.totalorder %s95, %s98
    %p107 = scmp.eq.s32.totalorder %s23, 3
    %p108 = por %p106, %p107
    %p109 = scmp.ne.s32.totalorder %s98, %s99
    %p110 = scmp.eq.s32.totalorder %s23, 0
    %p111 = por %p109, %p110
    %p112 = scmp.ne.s32.totalorder %s98, %s99
    %p113 = scmp.eq.s32.totalorder %s24, 3
    %p114 = por %p112, %p113
    %p116 = scmp.ne.s32.totalorder %s99, %s115
    %p117 = scmp.eq.s32.totalorder %s24, 0
    %p118 = por %p116, %p117
    %s119 = ssub.s32 %s25, %s37
    %p120 = scmp.eq.s32.totalorder %s119, 0
    %s122 = sadd.s32 %s121, 1
    %s123 = scalar_select %p120, %s121, %s122
    %p126 = pneg %p120
    %p127 = scmp.eq.s32.totalorder %s18, 3
    %p128 = por %p126, %p127
    %p129 = scmp.ne.s32.totalorder %s121, %s124
    %p130 = scmp.eq.s32.totalorder %s18, 0
    %p131 = por %p129, %p130
    %p132 = scmp.ne.s32.totalorder %s121, %s124
    %p133 = scmp.eq.s32.totalorder %s23, 3
    %p134 = por %p132, %p133
    %p135 = scmp.ne.s32.totalorder %s124, %s125
    %p136 = scmp.eq.s32.totalorder %s23, 0
    %p137 = por %p135, %p136
    %p138 = scmp.ne.s32.totalorder %s124, %s125
    %p139 = scmp.eq.s32.totalorder %s24, 3
    %p140 = por %p138, %p139
    %p142 = scmp.ne.s32.totalorder %s125, %s141
    %p143 = scmp.eq.s32.totalorder %s24, 0
    %p144 = por %p142, %p143
    %p145 = scmp.le.s32.totalorder 1, %s18
    %p146 = scmp.lt.s32.totalorder %s18, 5
    %p147 = pnand %p145, %p146
    %p148 = pneg %p147
    // Predicated region
    $region9: #{loss_adv.1} parent=5 // pred_check
      _
    $region10: #{loss_adv.1} parent=5 // pred_check_branch
      %150 = sbr.rel (%p147) target = $region12
    $region11: #{loss_adv.1} parent=5 // pred_region
      %s151 = ssub.s32 %s18, 1
      // Predicated region
      $region13: #{loss_adv.1} parent=11 // pred_check
        %p152 = pneg %p51
      $region14: #{loss_adv.1} parent=11 // pred_check_branch
        %154 = sbr.rel (%p152) target = $region16
      $region15: #{loss_adv.1} parent=11 // pred_region
        _
      $region16: #{loss_adv.1} parent=11 // pred_fallthru
        _
    $region12: #{loss_adv.1} parent=5 // pred_fallthru
      _
    %p155 = scmp.lt.s32.totalorder %s18, 4
    // Predicated region
    $region17: #{loss_adv.1} parent=5 // pred_check
      %p156 = pneg %p155
    $region18: #{loss_adv.1} parent=5 // pred_check_branch
      %158 = sbr.rel (%p156) target = $region20
    $region19: #{loss_adv.1} parent=5 // pred_region
      // Predicated region
      $region21: #{loss_adv.1} parent=19 // pred_check
        %p159 = pneg %p75
      $region22: #{loss_adv.1} parent=19 // pred_check_branch
        %161 = sbr.rel (%p159) target = $region24
      $region23: #{loss_adv.1} parent=19 // pred_region
        %s162 = smul.u32 %s25, 2
        %s163 = sadd.s32 %s162, %s26
        %s164 = smul.u32 4, %s163
        %p165 = scmp.lt.s32.totalorder %s164, 15
        %s166 = scalar_select %p165, %s164, 15
        %s167 = smul.addr %s166, 8
        %s168 = scalar_lea.vmem %s3, %s167
        %s169 = smul.u32 %s25, 2
        %s170 = sadd.s32 %s169, %s26
        %s171 = smul.u32 4, %s170
      $region24: #{loss_adv.1} parent=19 // pred_fallthru
        _
      // Predicated region
      $region25: #{loss_adv.1} parent=19 // pred_check
        %p172 = pneg %p105
      $region26: #{loss_adv.1} parent=19 // pred_check_branch
        %174 = sbr.rel (%p172) target = $region28
      $region27: #{loss_adv.1} parent=19 // pred_region
        %s175 = smul.u32 %s25, 2
        %s176 = sadd.s32 %s175, %s26
        %s177 = smul.u32 4, %s176
        %p178 = scmp.lt.s32.totalorder %s177, 15
        %s179 = scalar_select %p178, %s177, 15
        %s180 = smul.addr %s179, 8
        %s181 = scalar_lea.vmem %s4, %s180
        %s182 = smul.u32 %s25, 2
        %s183 = sadd.s32 %s182, %s26
        %s184 = smul.u32 4, %s183
      $region28: #{loss_adv.1} parent=19 // pred_fallthru
        _
    $region20: #{loss_adv.1} parent=5 // pred_fallthru
      _
    %p185 = scmp.le.s32.totalorder 1, %s18
    %p186 = scmp.lt.s32.totalorder %s18, 5
    %p187 = pnand %p185, %p186
    %p188 = pneg %p187
    // Predicated region
    $region29: #{loss_adv.1} parent=5 // pred_check
      _
    $region30: #{loss_adv.1} parent=5 // pred_check_branch
      %190 = sbr.rel (%p187) target = $region32
    $region31: #{loss_adv.1} parent=5 // pred_region
      %s191 = ssub.s32 %s18, 1
      %p192 = pneg %p51
      %p193 = pneg %p48
      %s194 = smul.u32 %s27, 2
      %s195 = sadd.s32 %s194, %s28
      %s196 = smul.u32 4, %s195
      %p197 = scmp.lt.s32.totalorder %s196, 15
      %s198 = scalar_select %p197, %s196, 15
      %s199 = smul.addr %s198, 8
      %s200 = scalar_lea.vmem %s3, %s199
      %p201 = pneg %p81
      %p202 = pneg %p78
      %s203 = smul.u32 %s27, 2
      %s204 = sadd.s32 %s203, %s28
      %s205 = smul.u32 4, %s204
      %p206 = scmp.lt.s32.totalorder %s205, 15
      %s207 = scalar_select %p206, %s205, 15
      %s208 = smul.addr %s207, 8
      %s209 = scalar_lea.vmem %s4, %s208
      %p210 = pneg %p111
      %p211 = pneg %p108
      %p212 = pneg %p137
      %p213 = pneg %p134
      %p214 = scmp.lt.s32.totalorder %s27, 1
      %s215 = scalar_select %p214, %s27, 1
      %s216 = scalar_lea.vmem %s5, %s215
      %s217 = smul.u32 %s27, 2
      %s218 = sadd.s32 %s217, %s28
      %s219 = smul.u32 4, %s218
      %p220 = scmp.lt.s32.totalorder %s219, 15
      %s221 = scalar_select %p220, %s219, 15
      %s222 = smul.addr %s221, 8
      %s223 = scalar_lea.vmem %s3, %s222
      %s224 = smul.u32 %s27, 2
      %s225 = sadd.s32 %s224, %s28
      %s226 = smul.u32 4, %s225
      %s227 = smul.u32 %s27, 2
      %s228 = sadd.s32 %s227, %s28
      %s229 = smul.u32 4, %s228
      %p230 = scmp.lt.s32.totalorder %s229, 15
      %s231 = scalar_select %p230, %s229, 15
      %s232 = smul.addr %s231, 8
      %s233 = scalar_lea.vmem %s4, %s232
      %s234 = smul.u32 %s27, 2
      %s235 = sadd.s32 %s234, %s28
      %s236 = smul.u32 4, %s235
      %p237 = scmp.lt.s32.totalorder %s27, 1
      %s238 = scalar_select %p237, %s27, 1
      %s239 = scalar_lea.vmem %s5, %s238
      %p240 = scmp.eq.s32.totalorder %s28, 0
      // Predicated region
      $region33: #{loss_adv.1} parent=31 // pred_check
        %p241 = pneg %p240
      $region34: #{loss_adv.1} parent=31 // pred_check_branch
        %243 = sbr.rel (%p241) target = $region36
      $region35: #{loss_adv.1} parent=31 // pred_region
        %244 = vst [vmem:[#allocation2] sm:$0xff] 0.0
        %245 = vst [vmem:[#allocation2 + $0x8] sm:$0xff] 0.0
        %246 = vst [vmem:[#allocation2 + $0x10] sm:$0xff] 0.0
        %247 = vst [vmem:[#allocation2 + $0x18] sm:$0xff] 0.0
      $region36: #{loss_adv.1} parent=31 // pred_fallthru
        _
      %s248 = smul.u32 %s27, 2
      %s249 = sadd.s32 %s248, %s28
      %s250 = sld [smem:[#allocation4 + %s249]]
      %v251 = vld [vmem:[%s223] sm:$0xff]
      %v252 = vld [vmem:[%s223 + $0x8] sm:$0xff]
      %v253 = vld [vmem:[%s223 + $0x10] sm:$0xff]
      %v254 = vld [vmem:[%s223 + $0x18] sm:$0xff]
      %v255 = vld [vmem:[%s233] sm:$0xff]
      %v256 = vld [vmem:[%s233 + $0x8] sm:$0xff]
      %v257 = vld [vmem:[%s233 + $0x10] sm:$0xff]
      %v258 = vld [vmem:[%s233 + $0x18] sm:$0xff]
      %v259 = vld [vmem:[#allocation2] sm:$0xff]
      %v260 = vld [vmem:[#allocation2 + $0x8] sm:$0xff]
      %v261 = vld [vmem:[#allocation2 + $0x10] sm:$0xff]
      %v262 = vld [vmem:[#allocation2 + $0x18] sm:$0xff]
      %v263 = vsub.f32 %v251, %v255
      %v264 = vsub.f32 %v252, %v256
      %v265 = vsub.f32 %v253, %v257
      %v266 = vsub.f32 %v254, %v258
      %v267 = vand.u32 2147483647, %v263
      %v268 = vand.u32 2147483647, %v264
      %v269 = vand.u32 2147483647, %v265
      %v270 = vand.u32 2147483647, %v266
      %v271 = vstv %s250
      %v272 = vmul.f32 %v267, %v271
      %v273 = vmul.f32 %v268, %v271
      %v274 = vmul.f32 %v269, %v271
      %v275 = vmul.f32 %v270, %v271
      %v276 = vadd.f32 %v259, %v272
      %v277 = vadd.f32 %v260, %v273
      %v278 = vadd.f32 %v261, %v274
      %v279 = vadd.f32 %v262, %v275
      %280 = vst [vmem:[#allocation2] sm:$0xff] %v276
      %281 = vst [vmem:[#allocation2 + $0x8] sm:$0xff] %v277
      %282 = vst [vmem:[#allocation2 + $0x10] sm:$0xff] %v278
      %283 = vst [vmem:[#allocation2 + $0x18] sm:$0xff] %v279
      %p284 = scmp.eq.s32.totalorder %s28, 1
      // Predicated region
      $region37: #{loss_adv.1} parent=31 // pred_check
        %p285 = pneg %p284
      $region38: #{loss_adv.1} parent=31 // pred_check_branch
        %287 = sbr.rel (%p285) target = $region40
      $region39: #{loss_adv.1} parent=31 // pred_region
        %v288 = vld [vmem:[#allocation2] sm:$0xff]
        %v289 = vld [vmem:[#allocation2 + $0x8] sm:$0xff]
        %v290 = vld [vmem:[#allocation2 + $0x10] sm:$0xff]
        %v291 = vld [vmem:[#allocation2 + $0x18] sm:$0xff]
        %v292 = vadd.f32 %v288, %v289
        %v293 = vadd.f32 %v292, %v290
        %v294 = vadd.f32 %v293, %v291
        %295 = vadd.xlane.f32.xlu0 %v294
        %v296 = vpop.xlane.xlu0 %295
        %v297 = vrot.slane %v296, 4
        %v298 = vadd.f32 %v296, %v297
        %v299 = vrot.slane %v298, 2
        %v300 = vadd.f32 %v298, %v299
        %v301 = vrot.slane %v300, 1
        %v302 = vadd.f32 %v300, %v301
        %s303 = vtos %v302
        %v304 = vld [vmem:[%s2] sm:$0xff]
        %305 = vadd.xlane.f32.xlu0 %v304
        %v306 = vpop.xlane.xlu0 %305
        %v307 = vrot.slane %v306, 4
        %v308 = vadd.f32 %v306, %v307
        %v309 = vrot.slane %v308, 2
        %v310 = vadd.f32 %v308, %v309
        %v311 = vrot.slane %v310, 1
        %v312 = vadd.f32 %v310, %v311
        %s313 = vtos %v312
        %s314 = sld [smem:[#allocation5]]
        %s315 = smul.f32 %s313, %s314
        %p316 = scmp.eq.s32.totalorder %s27, 0
        %s317 = scalar_select %p316, 1, 0
        %s318 = scvt.s32.f32 %s317
        %s319 = smul.f32 %s315, %s318
        %s320 = sadd.f32 %s303, %s319
        %v321 = vstv %s320
        %vm322 = vcmask 0
        %323 = vst.msk [vmem:[%s239] sm:$0x1] %vm322, %v321
      $region40: #{loss_adv.1} parent=31 // pred_fallthru
        _
      %p324 = scmp.lt.s32.totalorder %s27, 1
      %s325 = scalar_select %p324, %s27, 1
      %s326 = scalar_lea.vmem %s5, %s325
      // Predicated region
      $region41: #{loss_adv.1} parent=31 // pred_check
        %p327 = pneg %p134
      $region42: #{loss_adv.1} parent=31 // pred_check_branch
        %329 = sbr.rel (%p327) target = $region44
      $region43: #{loss_adv.1} parent=31 // pred_region
        _
      $region44: #{loss_adv.1} parent=31 // pred_fallthru
        _
    $region32: #{loss_adv.1} parent=5 // pred_fallthru
      _
    %p330 = scmp.le.s32.totalorder 2, %s18
    // Predicated region
    $region45: #{loss_adv.1} parent=5 // pred_check
      %p331 = pneg %p330
    $region46: #{loss_adv.1} parent=5 // pred_check_branch
      %333 = sbr.rel (%p331) target = $region48
    $region47: #{loss_adv.1} parent=5 // pred_region
      %s334 = ssub.s32 %s18, 2
      // Predicated region
      $region49: #{loss_adv.1} parent=47 // pred_check
        %p335 = pneg %p140
      $region50: #{loss_adv.1} parent=47 // pred_check_branch
        %337 = sbr.rel (%p335) target = $region52
      $region51: #{loss_adv.1} parent=47 // pred_region
        %p338 = scmp.lt.s32.totalorder %s29, 1
        %s339 = scalar_select %p338, %s29, 1
        %s340 = scalar_lea.vmem %s5, %s339
      $region52: #{loss_adv.1} parent=47 // pred_fallthru
        _
    $region48: #{loss_adv.1} parent=5 // pred_fallthru
      _
  $region6: #{loss_adv.1} parent=0 // loop_footer
    %s22 = sadd.s32 1, %s18
  $region7: #{loss_adv.1} parent=0 // loop_footer_branch
    %17 = sbr.rel target = $region3
  $region8: #{loss_adv.1} parent=0 // loop_exit
    _

</llo_original>
